<compile_context>
chip_gen: v7x
topology: tpu7x:2x2x1
jax: 0.10.0
libtpu: 0.0.40
codegen_flags: <defaults>
</compile_context>

<pallas_src>
import functools

import jax
import jax.numpy as jnp
from jax.experimental import pallas as pl
from jax.experimental.pallas import tpu as pltpu


def _round_up(x, m):
    return ((x + m - 1) // m) * m


# --------------------------------------------------------------------------- #
# Kernel
# --------------------------------------------------------------------------- #
def _reader_logprob_kernel(x_ref, w_ref, lab_ref, out_ref,
                           m_sc, l_sc, sel_sc, iota_sc, *, v_real, tv):
    # x_ref:   (tr, H)   bf16  flattened token hidden states
    # w_ref:   (H, tv)   bf16  vocab-projection tile k
    # lab_ref: (tr, 1)   int32 label token ids
    # out_ref: (tr, 128) f32   per-token logprob(label), lane-broadcast
    # m/l/sel: (tr, 1)   f32   online-LSE state + selected (label) logit
    # iota_sc: (1, tv)   int32 local column ids (filled once at k == 0)
    k = pl.program_id(1)
    nk = pl.num_programs(1)

    @pl.when(k == 0)
    def _init():
        m_sc[...] = jnp.full_like(m_sc, -jnp.inf)
        l_sc[...] = jnp.zeros_like(l_sc)
        sel_sc[...] = jnp.zeros_like(sel_sc)
        iota_sc[...] = jax.lax.broadcasted_iota(jnp.int32, iota_sc.shape, 1)

    # MXU matmul, f32 accumulation; no in-kernel reshape (done in the wrapper).
    logits = jnp.dot(x_ref[...], w_ref[...], preferred_element_type=jnp.float32)

    col = iota_sc[...]                                    # (1, tv) local ids

    # Mask vocab-padding columns (only the last tile can contain them).
    if v_real % tv != 0:
        keep = col < (v_real - k * tv)                    # (1, tv) bool, cheap
        logits = logits + jnp.where(keep, 0.0, -1e30)     # broadcast add over rows

    # ---- online log-sum-exp over the vocab axis (f32) ----
    m_prev = m_sc[...]
    m_new = jnp.maximum(m_prev, jnp.max(logits, axis=-1, keepdims=True))
    l_sc[...] = (l_sc[...] * jnp.exp(m_prev - m_new)
                 + jnp.sum(jnp.exp(logits - m_new), axis=-1, keepdims=True))
    m_sc[...] = m_new

    # ---- select the label logit from this tile (local ids, no full-size add) ----
    hit = col == (lab_ref[...] - k * tv)                  # (tr, tv) bool
    sel_sc[...] += jnp.sum(jnp.where(hit, logits, 0.0), axis=-1, keepdims=True)

    # ---- finalize: logp(label) = sel - lse; single lane-dense store ----
    @pl.when(k == nk - 1)
    def _finalize():
        lse = m_sc[...] + jnp.log(l_sc[...])
        logp = sel_sc[...] - lse                          # (tr, 1)
        out_ref[...] = jnp.broadcast_to(logp, out_ref.shape).astype(out_ref.dtype)


# --------------------------------------------------------------------------- #
# VMEM-aware tile selection
# --------------------------------------------------------------------------- #
def _vmem_capacity_bytes():
    try:
        return int(getattr(pltpu.get_tpu_info(), "vmem_capacity_bytes", 64 << 20))
    except Exception:
        return 64 << 20        # conservative fallback (v7x per-TensorCore)


def _vmem_bytes(tr, tv, h, w_bufs):
    w = w_bufs * h * tv * 2                # bf16 W tiles (multi-buffered)
    x = 2 * tr * h * 2                     # double-buffered bf16 x tile
    lab = 2 * tr * 128 * 4                 # int32 labels, lane-padded
    out = 2 * tr * 128 * 4                 # f32 output tile
    tmp = 3 * tr * tv * 4                  # f32 logits / exp / select temporaries
    scr = 3 * tr * 128 * 4 + tv * 4        # m / l / sel (lane-padded) + iota
    return w + x + lab + out + tmp + scr


def _select_tiles(n_rows, h, v, budget, row_target=768):
    """Pick (tr, tv): >= ~650-770 MXU rows per step (v6e/v7x W-streaming
    roofline; v5e saturates below that) and the largest lane-dense vocab tile
    that fits the VMEM budget."""
    np16 = _round_up(max(n_rows, 16), 16)
    tr = min(_round_up(row_target, 16), np16)

    # Keep >= 2 row blocks when the batch is large enough, so the "parallel"
    # row axis can still shard across both v7x TensorCores.
    if np16 <= tr and np16 >= 256:
        tr = _round_up((np16 + 1) // 2, 16)

    tv = 128
    for cand in (2048, 1024, 512, 256, 128):
        if cand <= _round_up(v, 128) and _vmem_bytes(tr, cand, h, 2) <= budget:
            tv = cand
            break

    while tr > 16 and _vmem_bytes(tr, tv, h, 2) > budget:
        tr = _round_up(tr // 2, 16)
    return tr, tv


# --------------------------------------------------------------------------- #
# Wrappers
# --------------------------------------------------------------------------- #
def reader_gpt_token_logprobs(x_rows, w_vocab, label_rows, *, tr=None, tv=None):
    """Per-token logprob(label) for flattened token rows.

    x_rows:     [N, H] float   token hidden states
    w_vocab:    [H, V] float   vocab projection
    label_rows: [N]    int     label token ids (0 <= id < V)
    returns:    [N]    float32 log p(label | token)
    """
    n, h = x_rows.shape
    v = w_vocab.shape[1]

    cap = _vmem_capacity_bytes()
    budget = (cap * 2) // 3
    auto_tr, auto_tv = _select_tiles(n, h, v, budget)
    tr = auto_tr if tr is None else tr
    tv = auto_tv if tv is None else tv
    assert tr % 8 == 0 and tv % 128 == 0, (tr, tv)

    n_pad = _round_up(max(n, tr), tr)
    v_pad = _round_up(v, tv)
    nb, nk = n_pad // tr, v_pad // tv

    xb = jnp.zeros((n_pad, h), jnp.bfloat16).at[:n].set(x_rows.astype(jnp.bfloat16))
    wb = jnp.zeros((h, v_pad), jnp.bfloat16).at[:, :v].set(w_vocab.astype(jnp.bfloat16))
    lab = jnp.zeros((n_pad, 1), jnp.int32).at[:n, 0].set(label_rows.astype(jnp.int32))

    # 3-deep pipelining on the big W stream only when useful and it fits VMEM.
    w_bufs = 3 if (nk >= 3 and _vmem_bytes(tr, tv, h, 3) <= budget) else 2
    w_idx = lambda b, k: (0, k)
    if w_bufs > 2:
        try:
            w_spec = pl.BlockSpec((h, tv), w_idx, pipeline_mode=pl.Buffered(w_bufs))
        except TypeError:  # BlockSpec without pipeline_mode support
            w_spec = pl.BlockSpec((h, tv), w_idx)
    else:
        w_spec = pl.BlockSpec((h, tv), w_idx)

    kernel = functools.partial(_reader_logprob_kernel, v_real=v, tv=tv)

    cost = pl.CostEstimate(
        flops=2 * n_pad * h * v_pad,
        transcendentals=n_pad * v_pad,
        bytes_accessed=nb * h * v_pad * 2 + n_pad * h * 2 + n_pad * (128 + 1) * 4,
    )

    out = pl.pallas_call(
        kernel,
        out_shape=jax.ShapeDtypeStruct((n_pad, 128), jnp.float32),
        grid_spec=pltpu.PrefetchScalarGridSpec(
            num_scalar_prefetch=0,
            grid=(nb, nk),
            in_specs=[
                pl.BlockSpec((tr, h), lambda b, k: (b, 0)),
                w_spec,
                pl.BlockSpec((tr, 1), lambda b, k: (b, 0)),
            ],
            out_specs=pl.BlockSpec((tr, 128), lambda b, k: (b, 0)),
            scratch_shapes=[
                pltpu.VMEM((tr, 1), jnp.float32),   # running max
                pltpu.VMEM((tr, 1), jnp.float32),   # running sum-exp
                pltpu.VMEM((tr, 1), jnp.float32),   # selected (label) logit
                pltpu.VMEM((1, tv), jnp.int32),     # local column ids
            ],
        ),
        compiler_params=pltpu.CompilerParams(
            dimension_semantics=("parallel", "arbitrary"),
            vmem_limit_bytes=int(budget),
        ),
        cost_estimate=cost,
    )(xb, wb, lab)

    return out[:n, 0]


def reader_gpt_scores(x, w_vocab, labels, *, tr=None, tv=None):
    """Per-context exp(sum_t logprob(label_t)) — get_scores()' `exp(score)`.

    x:       [B, S, H] float   context token hidden states
    w_vocab: [H, V]    float   vocab projection
    labels:  [B, S]    int     answer/label token ids
    returns: [B]       float32 scores
    """
    b, s, h = x.shape
    logp = reader_gpt_token_logprobs(
        x.reshape(b * s, h), w_vocab, labels.reshape(b * s), tr=tr, tv=tv)
    # Per-context sum over S tokens + exp is O(B*S) plumbing; kept outside the
    # kernel so the kernel never reshapes (B, S) rows across sublane tiles.
    return jnp.exp(jnp.sum(logp.reshape(b, s), axis=-1))


def _reference_scores(x, w_vocab, labels):
    # Reference uses the same bf16-rounded operands so only the kernel's
    # tiling / online-LSE / padding path is being validated.
    xb = x.astype(jnp.bfloat16).astype(jnp.float32)
    wb = w_vocab.astype(jnp.bfloat16).astype(jnp.float32)
    logits = jnp.einsum("bsh,hv->bsv", xb, wb)
    logp = jax.nn.log_softmax(logits, axis=-1)
    sel = jnp.take_along_axis(logp, labels[..., None], axis=-1)[..., 0]   # (B, S)
    return jnp.exp(jnp.sum(sel, axis=-1))                                 # (B,)


if __name__ == "__main__":
    # Small shapes consistent with a "reader" scoring B contexts of S tokens.
    # V is deliberately NOT a multiple of 128 to exercise the vocab-padding mask.
    B, S, H, V = 16, 8, 128, 500

    key = jax.random.PRNGKey(0)
    kx, kw, kl = jax.random.split(key, 3)

    x = jax.random.normal(kx, (B, S, H), dtype=jnp.float32)
    w_vocab = jax.random.normal(kw, (H, V), dtype=jnp.float32) * 0.05
    labels = jax.random.randint(kl, (B, S), minval=0, maxval=V)

    ref = _reference_scores(x, w_vocab, labels)

    # Explicit small tiles: grid (2 row blocks, 2 vocab tiles) exercises the
    # "parallel" row axis, the online-LSE vocab reduction, and the padded tile.
    scores = jax.block_until_ready(
        reader_gpt_scores(x, w_vocab, labels, tr=64, tv=256))
    assert scores.shape == (B,)
    assert jnp.allclose(jnp.log(scores), jnp.log(ref), atol=2e-3, rtol=0), (scores, ref)

    # Auto (VMEM-aware) tile-selection path.
    scores_auto = jax.block_until_ready(reader_gpt_scores(x, w_vocab, labels))
    assert jnp.allclose(jnp.log(scores_auto), jnp.log(ref), atol=2e-3, rtol=0)

    print("KERNEL_OK")
</pallas_src>

<mosaic_0001>
module attributes {stable_mosaic.version = 11 : i64} {
  func.func @_reader_logprob_kernel(%arg0: i32, %arg1: i32, %arg2: memref<64x128xbf16, #tpu.memory_space<vmem>>, %arg3: memref<128x256xbf16, #tpu.memory_space<vmem>>, %arg4: memref<64x1xi32, #tpu.memory_space<vmem>>, %arg5: memref<64x128xf32, #tpu.memory_space<vmem>>, %arg6: memref<64x1xf32, #tpu.memory_space<vmem>>, %arg7: memref<64x1xf32, #tpu.memory_space<vmem>>, %arg8: memref<64x1xf32, #tpu.memory_space<vmem>>, %arg9: memref<1x256xi32, #tpu.memory_space<vmem>>) attributes {dimension_semantics = [#tpu.dimension_semantics<parallel>, #tpu.dimension_semantics<arbitrary>], iteration_bounds = array<i64: 2, 2>, scalar_prefetch = 0 : i64, scratch_operands = 4 : i64, tpu.core_type = #tpu.core_type<tc>, window_params = [{transform_indices = @transform_0, window_bounds = array<i64: 64, 128>}, {transform_indices = @transform_1, window_bounds = array<i64: 128, 256>}, {transform_indices = @transform_2, window_bounds = array<i64: 64, 1>}, {transform_indices = @transform_3, window_bounds = array<i64: 64, 128>}]} {
    %c0_i32 = arith.constant 0 : i32
    %0 = arith.cmpi eq, %arg1, %c0_i32 : i32
    %1 = arith.extui %0 : i1 to i32
    %c0_i32_0 = arith.constant 0 : i32
    %2 = arith.cmpi ne, %1, %c0_i32_0 : i32
    scf.if %2 {
      %cst_28 = arith.constant 0xFF800000 : f32
      %49 = vector.broadcast %cst_28 : f32 to vector<64x1xf32>
      %c0_29 = arith.constant 0 : index
      %c0_30 = arith.constant 0 : index
      %50 = vector.load %arg6[%c0_29, %c0_30] : memref<64x1xf32, #tpu.memory_space<vmem>>, vector<64x1xf32>
      tpu.vector_store %arg6[%c0_29, %c0_30], %49 {strides = array<i32>} : memref<64x1xf32, #tpu.memory_space<vmem>>, vector<64x1xf32>,
      %cst_31 = arith.constant 0.000000e+00 : f32
      %51 = vector.broadcast %cst_31 : f32 to vector<64x1xf32>
      %c0_32 = arith.constant 0 : index
      %c0_33 = arith.constant 0 : index
      %52 = vector.load %arg7[%c0_32, %c0_33] : memref<64x1xf32, #tpu.memory_space<vmem>>, vector<64x1xf32>
      tpu.vector_store %arg7[%c0_32, %c0_33], %51 {strides = array<i32>} : memref<64x1xf32, #tpu.memory_space<vmem>>, vector<64x1xf32>,
      %cst_34 = arith.constant 0.000000e+00 : f32
      %53 = vector.broadcast %cst_34 : f32 to vector<64x1xf32>
      %c0_35 = arith.constant 0 : index
      %c0_36 = arith.constant 0 : index
      %54 = vector.load %arg8[%c0_35, %c0_36] : memref<64x1xf32, #tpu.memory_space<vmem>>, vector<64x1xf32>
      tpu.vector_store %arg8[%c0_35, %c0_36], %53 {strides = array<i32>} : memref<64x1xf32, #tpu.memory_space<vmem>>, vector<64x1xf32>,
      %55 = tpu.iota {dimensions = array<i32: 1>} : vector<1x256xi32>
      %c0_37 = arith.constant 0 : index
      %c0_38 = arith.constant 0 : index
      %56 = vector.load %arg9[%c0_37, %c0_38] : memref<1x256xi32, #tpu.memory_space<vmem>>, vector<1x256xi32>
      tpu.vector_store %arg9[%c0_37, %c0_38], %55 {strides = array<i32>} : memref<1x256xi32, #tpu.memory_space<vmem>>, vector<1x256xi32>,
    } else {
    }
    %c0 = arith.constant 0 : index
    %c0_1 = arith.constant 0 : index
    %3 = vector.load %arg2[%c0, %c0_1] : memref<64x128xbf16, #tpu.memory_space<vmem>>, vector<64x128xbf16>
    %c0_2 = arith.constant 0 : index
    %c0_3 = arith.constant 0 : index
    %4 = vector.load %arg3[%c0_2, %c0_3] : memref<128x256xbf16, #tpu.memory_space<vmem>>, vector<128x256xbf16>
    %cst = arith.constant dense<0.000000e+00> : vector<64x256xf32>
    %5 = tpu.matmul %3, %4, %cst {dimension_numbers = #tpu.dot_dimension_numbers<[1], [0], [0], [1], [0, 0, 1, 1], [], []>} : vector<64x128xbf16>, vector<128x256xbf16>, vector<64x256xf32> -> vector<64x256xf32>
    %c0_4 = arith.constant 0 : index
    %c0_5 = arith.constant 0 : index
    %6 = vector.load %arg9[%c0_4, %c0_5] : memref<1x256xi32, #tpu.memory_space<vmem>>, vector<1x256xi32>
    %c256_i32 = arith.constant 256 : i32
    %7 = arith.muli %arg1, %c256_i32 : i32
    %c500_i32 = arith.constant 500 : i32
    %8 = arith.subi %c500_i32, %7 : i32
    %9 = vector.broadcast %8 : i32 to vector<1x256xi32>
    %10 = arith.cmpi slt, %6, %9 : vector<1x256xi32>
    %cst_6 = arith.constant 0.000000e+00 : f32
    %cst_7 = arith.constant -1.000000e+30 : f32
    %11 = vector.broadcast %cst_6 : f32 to vector<1x256xf32>
    %12 = vector.broadcast %cst_7 : f32 to vector<1x256xf32>
    %13 = arith.select %10, %11, %12 : vector<1x256xi1>, vector<1x256xf32>
    %14 = vector.broadcast %13 : vector<1x256xf32> to vector<64x256xf32>
    %15 = arith.addf %5, %14 : vector<64x256xf32>
    %c0_8 = arith.constant 0 : index
    %c0_9 = arith.constant 0 : index
    %16 = vector.load %arg6[%c0_8, %c0_9] : memref<64x1xf32, #tpu.memory_space<vmem>>, vector<64x1xf32>
    %cst_10 = arith.constant dense<0xFF800000> : vector<64xf32>
    %17 = vector.multi_reduction <maximumf>, %15, %cst_10 [1] : vector<64x256xf32> to vector<64xf32>
    %18 = vector.shape_cast %17 : vector<64xf32> to vector<64x1xf32>
    %19 = arith.maximumf %16, %18 : vector<64x1xf32>
    %c0_11 = arith.constant 0 : index
    %c0_12 = arith.constant 0 : index
    %20 = vector.load %arg7[%c0_11, %c0_12] : memref<64x1xf32, #tpu.memory_space<vmem>>, vector<64x1xf32>
    %21 = arith.subf %16, %19 : vector<64x1xf32>
    %22 = math.exp %21 : vector<64x1xf32>
    %23 = arith.mulf %20, %22 : vector<64x1xf32>
    %24 = vector.broadcast %19 : vector<64x1xf32> to vector<64x256xf32>
    %25 = arith.subf %15, %24 : vector<64x256xf32>
    %26 = math.exp %25 : vector<64x256xf32>
    %cst_13 = arith.constant dense<0.000000e+00> : vector<64xf32>
    %27 = vector.multi_reduction <add>, %26, %cst_13 [1] : vector<64x256xf32> to vector<64xf32>
    %28 = vector.shape_cast %27 : vector<64xf32> to vector<64x1xf32>
    %29 = arith.addf %23, %28 : vector<64x1xf32>
    %c0_14 = arith.constant 0 : index
    %c0_15 = arith.constant 0 : index
    %30 = vector.load %arg7[%c0_14, %c0_15] : memref<64x1xf32, #tpu.memory_space<vmem>>, vector<64x1xf32>
    tpu.vector_store %arg7[%c0_14, %c0_15], %29 {strides = array<i32>} : memref<64x1xf32, #tpu.memory_space<vmem>>, vector<64x1xf32>,
    %c0_16 = arith.constant 0 : index
    %c0_17 = arith.constant 0 : index
    %31 = vector.load %arg6[%c0_16, %c0_17] : memref<64x1xf32, #tpu.memory_space<vmem>>, vector<64x1xf32>
    tpu.vector_store %arg6[%c0_16, %c0_17], %19 {strides = array<i32>} : memref<64x1xf32, #tpu.memory_space<vmem>>, vector<64x1xf32>,
    %c0_18 = arith.constant 0 : index
    %c0_19 = arith.constant 0 : index
    %32 = vector.load %arg4[%c0_18, %c0_19] : memref<64x1xi32, #tpu.memory_space<vmem>>, vector<64x1xi32>
    %c256_i32_20 = arith.constant 256 : i32
    %33 = arith.muli %arg1, %c256_i32_20 : i32
    %34 = vector.broadcast %33 : i32 to vector<64x1xi32>
    %35 = arith.subi %32, %34 : vector<64x1xi32>
    %36 = vector.broadcast %6 : vector<1x256xi32> to vector<64x256xi32>
    %37 = vector.broadcast %35 : vector<64x1xi32> to vector<64x256xi32>
    %38 = arith.cmpi eq, %36, %37 : vector<64x256xi32>
    %c0_21 = arith.constant 0 : index
    %c0_22 = arith.constant 0 : index
    %39 = vector.load %arg8[%c0_21, %c0_22] : memref<64x1xf32, #tpu.memory_space<vmem>>, vector<64x1xf32>
    %cst_23 = arith.constant 0.000000e+00 : f32
    %40 = vector.broadcast %cst_23 : f32 to vector<64x256xf32>
    %41 = arith.select %38, %15, %40 : vector<64x256xi1>, vector<64x256xf32>
    %cst_24 = arith.constant dense<0.000000e+00> : vector<64xf32>
    %42 = vector.multi_reduction <add>, %41, %cst_24 [1] : vector<64x256xf32> to vector<64xf32>
    %43 = vector.shape_cast %42 : vector<64xf32> to vector<64x1xf32>
    %44 = arith.addf %39, %43 : vector<64x1xf32>
    %c0_25 = arith.constant 0 : index
    %c0_26 = arith.constant 0 : index
    %45 = vector.load %arg8[%c0_25, %c0_26] : memref<64x1xf32, #tpu.memory_space<vmem>>, vector<64x1xf32>
    tpu.vector_store %arg8[%c0_25, %c0_26], %44 {strides = array<i32>} : memref<64x1xf32, #tpu.memory_space<vmem>>, vector<64x1xf32>,
    %c1_i32 = arith.constant 1 : i32
    %46 = arith.cmpi eq, %arg1, %c1_i32 : i32
    %47 = arith.extui %46 : i1 to i32
    %c0_i32_27 = arith.constant 0 : i32
    %48 = arith.cmpi ne, %47, %c0_i32_27 : i32
    scf.if %48 {
      %c0_28 = arith.constant 0 : index
      %c0_29 = arith.constant 0 : index
      %49 = vector.load %arg6[%c0_28, %c0_29] : memref<64x1xf32, #tpu.memory_space<vmem>>, vector<64x1xf32>
      %c0_30 = arith.constant 0 : index
      %c0_31 = arith.constant 0 : index
      %50 = vector.load %arg7[%c0_30, %c0_31] : memref<64x1xf32, #tpu.memory_space<vmem>>, vector<64x1xf32>
      %51 = math.log %50 : vector<64x1xf32>
      %52 = arith.addf %49, %51 : vector<64x1xf32>
      %c0_32 = arith.constant 0 : index
      %c0_33 = arith.constant 0 : index
      %53 = vector.load %arg8[%c0_32, %c0_33] : memref<64x1xf32, #tpu.memory_space<vmem>>, vector<64x1xf32>
      %54 = arith.subf %53, %52 : vector<64x1xf32>
      %55 = vector.shape_cast %54 : vector<64x1xf32> to vector<64x1xf32>
      %56 = vector.broadcast %55 : vector<64x1xf32> to vector<64x128xf32>
      %c0_34 = arith.constant 0 : index
      %c0_35 = arith.constant 0 : index
      %57 = vector.load %arg5[%c0_34, %c0_35] : memref<64x128xf32, #tpu.memory_space<vmem>>, vector<64x128xf32>
      tpu.vector_store %arg5[%c0_34, %c0_35], %56 {strides = array<i32>} : memref<64x128xf32, #tpu.memory_space<vmem>>, vector<64x128xf32>,
    } else {
    }
    return
  }
  func.func @transform_0(%arg0: i32, %arg1: i32) -> (i32, i32) {
    %c0_i32 = arith.constant 0 : i32
    %c0_i32_0 = arith.constant 0 : i32
    return %arg0, %c0_i32 : i32, i32
  }
  func.func @transform_1(%arg0: i32, %arg1: i32) -> (i32, i32) {
    %c0_i32 = arith.constant 0 : i32
    %c0_i32_0 = arith.constant 0 : i32
    return %c0_i32, %arg1 : i32, i32
  }
  func.func @transform_2(%arg0: i32, %arg1: i32) -> (i32, i32) {
    %c0_i32 = arith.constant 0 : i32
    %c0_i32_0 = arith.constant 0 : i32
    return %arg0, %c0_i32 : i32, i32
  }
  func.func @transform_3(%arg0: i32, %arg1: i32) -> (i32, i32) {
    %c0_i32 = arith.constant 0 : i32
    %c0_i32_0 = arith.constant 0 : i32
    return %arg0, %c0_i32 : i32, i32
  }
}

</mosaic_0001>

<llo_original>
// kernel: tpu_custom_call.1
$region0: #{tpu_custom_call.1}
  #allocation0 [shape = 'u32[]', space=smem, size = 0x4, offset = 0x4, fixed_abs, tag = 'smem constant byte address 0x4 - core index']
  #allocation1 [shape = 'u32[144,128]{1,0:T(1,128)}', space=vmem, size = 0x12000, scoped, tag = 'internal scratch']
  #allocation2 [shape = 'f32[64,1]{1,0:T(8,128)}', space=vmem, size = 0x8000, scoped, tag = 'scratch operand']
  #allocation3 [shape = 'f32[64,1]{1,0:T(8,128)}', space=vmem, size = 0x8000, scoped, tag = 'scratch operand']
  #allocation4 [shape = 'f32[64,1]{1,0:T(8,128)}', space=vmem, size = 0x8000, scoped, tag = 'scratch operand']
  #allocation5 [shape = 's32[1,256]{1,0:T(1,128)}', space=vmem, size = 0x400, scoped, tag = 'scratch operand']
  %s0 = inlined_call_operand.vmem [shape: bf16[128,128], index: 0, kind: input, shape index: {}]
  %s1 = inlined_call_operand.hbm [shape: bf16[128,512], index: 1, kind: input, shape index: {}]
  %s2 = inlined_call_operand.vmem [shape: s32[128,1], index: 2, kind: input, shape index: {}]
  %s3 = inlined_call_operand.hbm [shape: f32[128,128], index: 3, kind: output, shape index: {}]
  %s4 = sld [smem:[#allocation0]]
  $region57: #{tpu_custom_call.1} parent=0
    _
  %s6 = ssub.s32 1, %s4
  %s7 = scalar_select 0, %s6, %s4
  $region1: #{tpu_custom_call.1} parent=0
    #allocation6 [shape = 'u8[131072]{0}', space=vmem, size = 0x20000, scoped, tag = 'input window, operand 1']
    #allocation7 [shape = 's32[2]{0}', space=sflag, size = 0x8, scoped, tag = 'scoped memory for tpu_custom_call.1']
    #allocation8 [shape = 's32[2]{0}', space=sflag, size = 0x8, scoped, tag = 'scoped memory for tpu_custom_call.1']
    #allocation9 [shape = 'u8[65536]{0}', space=vmem, size = 0x10000, scoped, tag = 'output window, operand 0']
    %8 = vsyncpa [#allocation7], 0
    %s9 = scalar_lea.sflag [#allocation7], 1
    %10 = vsyncpa %s9, 0
    %11 = vsyncpa [#allocation8], 0
    %s12 = scalar_lea.sflag [#allocation8], 1
    %13 = vsyncpa %s12, 0
    loop: start=0, step=1, limit=6
    $region2: #{tpu_custom_call.1} parent=1 // loop_pre_header
      _
    $region3: #{tpu_custom_call.1} parent=1 // loop_header
      %s15 = sphi 0, %s19
      %p16 = scmp.ge.s32.totalorder %s15, 6
      %s22 = sphi 0, %s34
      %s23 = sphi 0, %s30
      %s24 = sphi 0, %s22
      %s25 = sphi 0, %s23
      %s26 = sphi 0, %s24
      %s27 = sphi 0, %s25
      %s37 = sphi 0, %s39
      %s40 = sphi 0, %s37
      %s41 = sphi 0, %s40
      %s57 = sphi 0, %s41
      %s63 = sphi 0, %s65
      %s66 = sphi 0, %s63
      %s67 = sphi 0, %s66
      %s83 = sphi 0, %s67
      %s89 = sphi 0, %s91
      %s92 = sphi 0, %s89
      %s93 = sphi 0, %s92
      %s109 = sphi 0, %s93
      %s115 = sphi 0, %s117
      %s118 = sphi 0, %s115
      %s119 = sphi 0, %s118
      %s135 = sphi 0, %s119
    $region4: #{tpu_custom_call.1} parent=1 // loop_header_branch
      %18 = sbr.rel (%p16) target = $region8
    $region5: #{tpu_custom_call.1} parent=1 // loop_body
      %s20 = ssub.s32 %s15, 1
      %s21 = ssub.s32 %s15, 2
      %s28 = sadd.s32 1, %s23
      %p29 = scmp.ge.s32.totalorder %s28, 2
      %s30 = scalar_select %p29, 0, %s28
      %s31 = sadd.s32 1, %s22
      %s32 = scalar_select %p29, %s31, %s22
      %p33 = scmp.ge.s32.totalorder %s32, 2
      %s34 = scalar_select %p33, 0, %s32
      %s35 = ssub.s32 %s22, %s34
      %p36 = scmp.eq.s32.totalorder %s35, 0
      %s38 = sadd.s32 %s37, 1
      %s39 = scalar_select %p36, %s37, %s38
      %p42 = pneg %p36
      %p43 = scmp.eq.s32.totalorder %s15, 3
      %p44 = por %p42, %p43
      %p45 = scmp.ne.s32.totalorder %s37, %s40
      %p46 = scmp.eq.s32.totalorder %s15, 0
      %p47 = por %p45, %p46
      %p48 = scmp.ne.s32.totalorder %s37, %s40
      %p49 = scmp.eq.s32.totalorder %s20, 3
      %p50 = por %p48, %p49
      %p51 = scmp.ne.s32.totalorder %s40, %s41
      %p52 = scmp.eq.s32.totalorder %s20, 0
      %p53 = por %p51, %p52
      %p54 = scmp.ne.s32.totalorder %s40, %s41
      %p55 = scmp.eq.s32.totalorder %s21, 3
      %p56 = por %p54, %p55
      %p58 = scmp.ne.s32.totalorder %s41, %s57
      %p59 = scmp.eq.s32.totalorder %s21, 0
      %p60 = por %p58, %p59
      %s61 = ssub.s32 %s23, %s30
      %p62 = scmp.eq.s32.totalorder %s61, 0
      %s64 = sadd.s32 %s63, 1
      %s65 = scalar_select %p62, %s63, %s64
      %p68 = pneg %p62
      %p69 = scmp.eq.s32.totalorder %s15, 3
      %p70 = por %p68, %p69
      %p71 = scmp.ne.s32.totalorder %s63, %s66
      %p72 = scmp.eq.s32.totalorder %s15, 0
      %p73 = por %p71, %p72
      %p74 = scmp.ne.s32.totalorder %s63, %s66
      %p75 = scmp.eq.s32.totalorder %s20, 3
      %p76 = por %p74, %p75
      %p77 = scmp.ne.s32.totalorder %s66, %s67
      %p78 = scmp.eq.s32.totalorder %s20, 0
      %p79 = por %p77, %p78
      %p80 = scmp.ne.s32.totalorder %s66, %s67
      %p81 = scmp.eq.s32.totalorder %s21, 3
      %p82 = por %p80, %p81
      %p84 = scmp.ne.s32.totalorder %s67, %s83
      %p85 = scmp.eq.s32.totalorder %s21, 0
      %p86 = por %p84, %p85
      %s87 = ssub.s32 %s22, %s34
      %p88 = scmp.eq.s32.totalorder %s87, 0
      %s90 = sadd.s32 %s89, 1
      %s91 = scalar_select %p88, %s89, %s90
      %p94 = pneg %p88
      %p95 = scmp.eq.s32.totalorder %s15, 3
      %p96 = por %p94, %p95
      %p97 = scmp.ne.s32.totalorder %s89, %s92
      %p98 = scmp.eq.s32.totalorder %s15, 0
      %p99 = por %p97, %p98
      %p100 = scmp.ne.s32.totalorder %s89, %s92
      %p101 = scmp.eq.s32.totalorder %s20, 3
      %p102 = por %p100, %p101
      %p103 = scmp.ne.s32.totalorder %s92, %s93
      %p104 = scmp.eq.s32.totalorder %s20, 0
      %p105 = por %p103, %p104
      %p106 = scmp.ne.s32.totalorder %s92, %s93
      %p107 = scmp.eq.s32.totalorder %s21, 3
      %p108 = por %p106, %p107
      %p110 = scmp.ne.s32.totalorder %s93, %s109
      %p111 = scmp.eq.s32.totalorder %s21, 0
      %p112 = por %p110, %p111
      %s113 = ssub.s32 %s22, %s34
      %p114 = scmp.eq.s32.totalorder %s113, 0
      %s116 = sadd.s32 %s115, 1
      %s117 = scalar_select %p114, %s115, %s116
      %p120 = pneg %p114
      %p121 = scmp.eq.s32.totalorder %s15, 3
      %p122 = por %p120, %p121
      %p123 = scmp.ne.s32.totalorder %s115, %s118
      %p124 = scmp.eq.s32.totalorder %s15, 0
      %p125 = por %p123, %p124
      %p126 = scmp.ne.s32.totalorder %s115, %s118
      %p127 = scmp.eq.s32.totalorder %s20, 3
      %p128 = por %p126, %p127
      %p129 = scmp.ne.s32.totalorder %s118, %s119
      %p130 = scmp.eq.s32.totalorder %s20, 0
      %p131 = por %p129, %p130
      %p132 = scmp.ne.s32.totalorder %s118, %s119
      %p133 = scmp.eq.s32.totalorder %s21, 3
      %p134 = por %p132, %p133
      %p136 = scmp.ne.s32.totalorder %s119, %s135
      %p137 = scmp.eq.s32.totalorder %s21, 0
      %p138 = por %p136, %p137
      %p139 = scmp.le.s32.totalorder 1, %s15
      %p140 = scmp.lt.s32.totalorder %s15, 5
      %p141 = pnand %p139, %p140
      %p142 = pneg %p141
      // Predicated region
      $region9: #{tpu_custom_call.1} parent=5 // pred_check
        _
      $region10: #{tpu_custom_call.1} parent=5 // pred_check_branch
        %144 = sbr.rel (%p141) target = $region12
      $region11: #{tpu_custom_call.1} parent=5 // pred_region
        %s145 = ssub.s32 %s15, 1
      $region12: #{tpu_custom_call.1} parent=5 // pred_fallthru
        _
      %p146 = scmp.lt.s32.totalorder %s15, 4
      // Predicated region
      $region13: #{tpu_custom_call.1} parent=5 // pred_check
        %p147 = pneg %p146
      $region14: #{tpu_custom_call.1} parent=5 // pred_check_branch
        %149 = sbr.rel (%p147) target = $region16
      $region15: #{tpu_custom_call.1} parent=5 // pred_region
        // Predicated region
        $region17: #{tpu_custom_call.1} parent=15 // pred_check
          %p150 = pneg %p47
        $region18: #{tpu_custom_call.1} parent=15 // pred_check_branch
          %152 = sbr.rel (%p150) target = $region20
        $region19: #{tpu_custom_call.1} parent=15 // pred_region
          %s153 = smul.u32 8, %s22
          %p154 = scmp.lt.s32.totalorder %s153, 15
          %s155 = scalar_select %p154, %s153, 15
          %s156 = smul.addr %s155, 4
          %s157 = scalar_lea.vmem %s0, %s156
          %s158 = smul.u32 8, %s22
        $region20: #{tpu_custom_call.1} parent=15 // pred_fallthru
          _
        // Predicated region
        $region21: #{tpu_custom_call.1} parent=15 // pred_check
          %p159 = pneg %p73
        $region22: #{tpu_custom_call.1} parent=15 // pred_check_branch
          %161 = sbr.rel (%p159) target = $region24
        $region23: #{tpu_custom_call.1} parent=15 // pred_region
          %s162 = sand.u32 %s63, 1
          %s163 = scalar_lea.sflag [#allocation7], %s162
          %s164 = sand.u32 %s63, 1
          %s165 = smul.addr %s164, 128
          %s166 = scalar_lea.vmem [#allocation6], %s165
          %s167 = smul.u32 2, %s23
          %s169 = ssub.s32 2048, 2048
          %170 = vsyncadd %s163, %s169
          %s171 = smul.addr %s167, 64
          %s172 = scalar_lea.hbm %s1, %s171
          %s173 = sshll.u32 %s166, 4
          %s174 = int_to_ptr.vmem [resolvable:$true] %s173
          %179 = dma.hbm_to_vmem [thread:$0]  %s172, 2048, %s174, %s163, 256, 128, 8
        $region24: #{tpu_custom_call.1} parent=15 // pred_fallthru
          _
        // Predicated region
        $region25: #{tpu_custom_call.1} parent=15 // pred_check
          %p180 = pneg %p99
        $region26: #{tpu_custom_call.1} parent=15 // pred_check_branch
          %182 = sbr.rel (%p180) target = $region28
        $region27: #{tpu_custom_call.1} parent=15 // pred_region
          %s183 = smul.u32 8, %s22
          %p184 = scmp.lt.s32.totalorder %s183, 15
          %s185 = scalar_select %p184, %s183, 15
          %s186 = smul.addr %s185, 8
          %s187 = scalar_lea.vmem %s2, %s186
          %s188 = smul.u32 8, %s22
        $region28: #{tpu_custom_call.1} parent=15 // pred_fallthru
          _
      $region16: #{tpu_custom_call.1} parent=5 // pred_fallthru
        _
      %p189 = scmp.le.s32.totalorder 1, %s15
      %p190 = scmp.lt.s32.totalorder %s15, 5
      %p191 = pnand %p189, %p190
      %p192 = pneg %p191
      // Predicated region
      $region29: #{tpu_custom_call.1} parent=5 // pred_check
        _
      $region30: #{tpu_custom_call.1} parent=5 // pred_check_branch
        %194 = sbr.rel (%p191) target = $region32
      $region31: #{tpu_custom_call.1} parent=5 // pred_region
        %s195 = ssub.s32 %s15, 1
        %s196 = sand.u32 %s66, 1
        %s197 = scalar_lea.sflag [#allocation7], %s196
        %s198 = sand.u32 %s66, 1
        %s199 = smul.addr %s198, 128
        %s200 = scalar_lea.vmem [#allocation6], %s199
        // Predicated region
        $region33: #{tpu_custom_call.1} parent=31 // pred_check
          %p201 = pneg %p79
        $region34: #{tpu_custom_call.1} parent=31 // pred_check_branch
          %203 = sbr.rel (%p201) target = $region36
        $region35: #{tpu_custom_call.1} parent=31 // pred_region
          %204 = dma.done %s197, 2048
        $region36: #{tpu_custom_call.1} parent=31 // pred_fallthru
          _
        %s205 = smul.u32 8, %s24
        %p206 = scmp.lt.s32.totalorder %s205, 15
        %s207 = scalar_select %p206, %s205, 15
        %s208 = smul.addr %s207, 4
        %s209 = scalar_lea.vmem %s0, %s208
        %p210 = pneg %p53
        %p211 = pneg %p50
        %s212 = sand.u32 %s66, 1
        %s213 = scalar_lea.sflag [#allocation7], %s212
        %s214 = sand.u32 %s66, 1
        %s215 = smul.addr %s214, 128
        %s216 = scalar_lea.vmem [#allocation6], %s215
        %p217 = pneg %p79
        %p218 = pneg %p76
        %s219 = smul.u32 8, %s24
        %p220 = scmp.lt.s32.totalorder %s219, 15
        %s221 = scalar_select %p220, %s219, 15
        %s222 = smul.addr %s221, 8
        %s223 = scalar_lea.vmem %s2, %s222
        %p224 = pneg %p105
        %p225 = pneg %p102
        %p226 = pneg %p131
        %p227 = pneg %p128
        %s228 = sand.u32 %s118, 1
        %s229 = scalar_lea.sflag [#allocation8], %s228
        %s230 = sand.u32 %s118, 1
        %s231 = smul.addr %s230, 64
        %s232 = scalar_lea.vmem [#allocation9], %s231
        %s233 = smul.u32 8, %s24
        %p234 = scmp.lt.s32.totalorder %s233, 15
        %s235 = scalar_select %p234, %s233, 15
        %s236 = smul.addr %s235, 4
        %s237 = scalar_lea.vmem %s0, %s236
        %s238 = smul.u32 8, %s24
        %s239 = smul.u32 2, %s25
        %s240 = smul.u32 8, %s24
        %p241 = scmp.lt.s32.totalorder %s240, 15
        %s242 = scalar_select %p241, %s240, 15
        %s243 = smul.addr %s242, 8
        %s244 = scalar_lea.vmem %s2, %s243
        %s245 = smul.u32 8, %s24
        %s246 = smul.u32 8, %s24
        %p248 = scmp.eq.s32.totalorder %s25, 0
        // Predicated region
        $region37: #{tpu_custom_call.1} parent=31 // pred_check
          %p249 = pneg %p248
        $region38: #{tpu_custom_call.1} parent=31 // pred_check_branch
          %251 = sbr.rel (%p249) target = $region40
        $region39: #{tpu_custom_call.1} parent=31 // pred_region
          %vm252 = vcmask 7168
          %253 = vst.msk [vmem:[#allocation2] sm:$0xff] %vm252, -inf
          %254 = vst.msk [vmem:[#allocation2 + $0x8] sm:$0xff] %vm252, -inf
          %255 = vst.msk [vmem:[#allocation2 + $0x10] sm:$0xff] %vm252, -inf
          %256 = vst.msk [vmem:[#allocation2 + $0x18] sm:$0xff] %vm252, -inf
          %257 = vst.msk [vmem:[#allocation2 + $0x20] sm:$0xff] %vm252, -inf
          %258 = vst.msk [vmem:[#allocation2 + $0x28] sm:$0xff] %vm252, -inf
          %259 = vst.msk [vmem:[#allocation2 + $0x30] sm:$0xff] %vm252, -inf
          %260 = vst.msk [vmem:[#allocation2 + $0x38] sm:$0xff] %vm252, -inf
          %261 = vst.msk [vmem:[#allocation3] sm:$0xff] %vm252, 0.0
          %262 = vst.msk [vmem:[#allocation3 + $0x8] sm:$0xff] %vm252, 0.0
          %263 = vst.msk [vmem:[#allocation3 + $0x10] sm:$0xff] %vm252, 0.0
          %264 = vst.msk [vmem:[#allocation3 + $0x18] sm:$0xff] %vm252, 0.0
          %265 = vst.msk [vmem:[#allocation3 + $0x20] sm:$0xff] %vm252, 0.0
          %266 = vst.msk [vmem:[#allocation3 + $0x28] sm:$0xff] %vm252, 0.0
          %267 = vst.msk [vmem:[#allocation3 + $0x30] sm:$0xff] %vm252, 0.0
          %268 = vst.msk [vmem:[#allocation3 + $0x38] sm:$0xff] %vm252, 0.0
          %269 = vst.msk [vmem:[#allocation4] sm:$0xff] %vm252, 0.0
          %270 = vst.msk [vmem:[#allocation4 + $0x8] sm:$0xff] %vm252, 0.0
          %271 = vst.msk [vmem:[#allocation4 + $0x10] sm:$0xff] %vm252, 0.0
          %272 = vst.msk [vmem:[#allocation4 + $0x18] sm:$0xff] %vm252, 0.0
          %273 = vst.msk [vmem:[#allocation4 + $0x20] sm:$0xff] %vm252, 0.0
          %274 = vst.msk [vmem:[#allocation4 + $0x28] sm:$0xff] %vm252, 0.0
          %275 = vst.msk [vmem:[#allocation4 + $0x30] sm:$0xff] %vm252, 0.0
          %276 = vst.msk [vmem:[#allocation4 + $0x38] sm:$0xff] %vm252, 0.0
          %v277 = vlaneseq
          %v278 = vand.u32 %v277, 127
          %v279 = vadd.s32 %v278, 128
          %v280 = vcombine.low %v278, %v279
          %v282 = vunpack.c.l.s4 1966171168
          %v283 = vunpack.c.0.s8 %v282
          %v284 = vlaneseq
          %v285 = vshrl.u32 %v284, 7
          %v286 = vsub.s32 %v283, %v285
          %v287 = vrot.slane %v280, %v286
          %v289 = vunpack.c.l.s4 1966171168
          %v290 = vunpack.c.0.s8 %v289
          %v291 = vlaneseq
          %v292 = vshrl.u32 %v291, 7
          %v293 = vsub.s32 %v290, %v292
          %v294 = vrot.slane %v287, %v293
          %v295 = vlaneseq
          %vm296 = vcmp.ge.s32.totalorder %v295, 0
          %vm297 = vcmp.lt.s32.totalorder %v295, 256
          %vm298 = vmand %vm296, %vm297
          %299 = vst.msk [vmem:[#allocation5] sm:$0x3] %vm298, %v294
        $region40: #{tpu_custom_call.1} parent=31 // pred_fallthru
          _
        %v300 = vld [vmem:[%s237] sm:$0xf]
        %v301 = vld [vmem:[%s237 + $0x4] sm:$0xf]
        %v302 = vld [vmem:[%s237 + $0x8] sm:$0xf]
        %v303 = vld [vmem:[%s237 + $0xc] sm:$0xf]
        %v304 = vld [vmem:[%s237 + $0x10] sm:$0xf]
        %v305 = vld [vmem:[%s237 + $0x14] sm:$0xf]
        %v306 = vld [vmem:[%s237 + $0x18] sm:$0xf]
        %v307 = vld [vmem:[%s237 + $0x1c] sm:$0xf]
        %v308 = vld [vmem:[%s200] sm:$0xff]
        %v309 = vld [vmem:[%s200 + $0x8] sm:$0xff]
        %v310 = vld [vmem:[%s200 + $0x10] sm:$0xff]
        %v311 = vld [vmem:[%s200 + $0x18] sm:$0xff]
        %v312 = vld [vmem:[%s200 + $0x20] sm:$0xff]
        %v313 = vld [vmem:[%s200 + $0x28] sm:$0xff]
        %v314 = vld [vmem:[%s200 + $0x30] sm:$0xff]
        %v315 = vld [vmem:[%s200 + $0x38] sm:$0xff]
        %v316 = vld [vmem:[%s200 + $0x40] sm:$0xff]
        %v317 = vld [vmem:[%s200 + $0x48] sm:$0xff]
        %v318 = vld [vmem:[%s200 + $0x50] sm:$0xff]
        %v319 = vld [vmem:[%s200 + $0x58] sm:$0xff]
        %v320 = vld [vmem:[%s200 + $0x60] sm:$0xff]
        %v321 = vld [vmem:[%s200 + $0x68] sm:$0xff]
        %v322 = vld [vmem:[%s200 + $0x70] sm:$0xff]
        %v323 = vld [vmem:[%s200 + $0x78] sm:$0xff]
        %v324 = vld [vmem:[#allocation5] sm:$0x3]
        %s325 = smul.u32 %s25, 256
        %s326 = ssub.s32 500, %s325
        %v327 = vstv %s326
        %vm328 = vcmp.lt.s32.totalorder %v324, %v327
        %v329 = vsel %vm328, 0.0, -1e+30
        %v331 = vlaneseq
        %v332 = vshrl.u32 %v331, 7
        %v333 = vsub.s32 0, %v332
        %v334 = vrot.slane %v329, %v333
        %v335 = vlaneseq
        %v336 = vshrl.u32 %v335, 7
        %v337 = vsub.s32 1, %v336
        %v338 = vrot.slane %v329, %v337
        %v349 = vunpack.c.l.b16 %v300
        %v350 = vunpack.c.l.b16 %v301
        %v351 = vunpack.c.l.b16 %v302
        %v352 = vunpack.c.l.b16 %v303
        %v353 = vunpack.c.l.b16 %v304
        %v354 = vunpack.c.l.b16 %v305
        %v355 = vunpack.c.l.b16 %v306
        %v356 = vunpack.c.l.b16 %v307
        %v357 = vpack.c.b16 %v350, %v349
        %v358 = vpack.c.b16 %v352, %v351
        %v359 = vpack.c.b16 %v354, %v353
        %v360 = vpack.c.b16 %v356, %v355
        %v381 = vunpack.c.l.b16 %v308
        %v382 = vunpack.c.h.b16 %v308
        %v383 = vunpack.c.l.b16 %v309
        %v384 = vunpack.c.h.b16 %v309
        %v385 = vunpack.c.l.b16 %v310
        %v386 = vunpack.c.h.b16 %v310
        %v387 = vunpack.c.l.b16 %v311
        %v388 = vunpack.c.h.b16 %v311
        %v389 = vunpack.c.l.b16 %v312
        %v390 = vunpack.c.h.b16 %v312
        %v391 = vunpack.c.l.b16 %v313
        %v392 = vunpack.c.h.b16 %v313
        %v393 = vunpack.c.l.b16 %v314
        %v394 = vunpack.c.h.b16 %v314
        %v395 = vunpack.c.l.b16 %v315
        %v396 = vunpack.c.h.b16 %v315
        %v397 = vunpack.c.l.b16 %v316
        %v398 = vunpack.c.h.b16 %v316
        %v399 = vunpack.c.l.b16 %v317
        %v400 = vunpack.c.h.b16 %v317
        %v401 = vunpack.c.l.b16 %v318
        %v402 = vunpack.c.h.b16 %v318
        %v403 = vunpack.c.l.b16 %v319
        %v404 = vunpack.c.h.b16 %v319
        %v405 = vunpack.c.l.b16 %v320
        %v406 = vunpack.c.h.b16 %v320
        %v407 = vunpack.c.l.b16 %v321
        %v408 = vunpack.c.h.b16 %v321
        %v409 = vunpack.c.l.b16 %v322
        %v410 = vunpack.c.h.b16 %v322
        %v411 = vunpack.c.l.b16 %v323
        %v412 = vunpack.c.h.b16 %v323
        %v413 = vpack.c.b16 %v383, %v381
        %v414 = vpack.c.b16 %v384, %v382
        %v415 = vpack.c.b16 %v387, %v385
        %v416 = vpack.c.b16 %v388, %v386
        %v417 = vpack.c.b16 %v391, %v389
        %v418 = vpack.c.b16 %v392, %v390
        %v419 = vpack.c.b16 %v395, %v393
        %v420 = vpack.c.b16 %v396, %v394
        %v421 = vpack.c.b16 %v399, %v397
        %v422 = vpack.c.b16 %v400, %v398
        %v423 = vpack.c.b16 %v403, %v401
        %v424 = vpack.c.b16 %v404, %v402
        %v425 = vpack.c.b16 %v407, %v405
        %v426 = vpack.c.b16 %v408, %v406
        %v427 = vpack.c.b16 %v411, %v409
        %v428 = vpack.c.b16 %v412, %v410
        %445 = vmatprep.subr.bf16.mxu0 %v414
        %446 = vmatpush1.bf16.msra.mxu0 %v413
        %447 = vmatprep.subr.bf16.mxu0 %v416
        %448 = vmatpush1.bf16.msra.mxu0 %v415
        %449 = vmatprep.subr.bf16.mxu0 %v418
        %450 = vmatpush1.bf16.msra.mxu0 %v417
        %451 = vmatprep.subr.bf16.mxu0 %v420
        %452 = vmatpush1.bf16.msra.mxu0 %v419
        %453 = vmatprep.subr.bf16.mxu0 %v422
        %454 = vmatpush1.bf16.msra.mxu0 %v421
        %455 = vmatprep.subr.bf16.mxu0 %v424
        %456 = vmatpush1.bf16.msra.mxu0 %v423
        %457 = vmatprep.subr.bf16.mxu0 %v426
        %458 = vmatpush1.bf16.msra.mxu0 %v425
        %459 = vmatprep.subr.bf16.mxu0 %v428
        %460 = vmatpush1.bf16.msra.mxu0 %v427
        %461 = vmatprep.subr.bf16.mxu0 0
        %462 = vmatpush1.bf16.msra.mxu0 0
        %463 = vmatprep.subr.bf16.mxu0 0
        %464 = vmatpush1.bf16.msra.mxu0 0
        %465 = vmatprep.subr.bf16.mxu0 0
        %466 = vmatpush1.bf16.msra.mxu0 0
        %467 = vmatprep.subr.bf16.mxu0 0
        %468 = vmatpush1.bf16.msra.mxu0 0
        %469 = vmatprep.subr.bf16.mxu0 0
        %470 = vmatpush1.bf16.msra.mxu0 0
        %471 = vmatprep.subr.bf16.mxu0 0
        %472 = vmatpush1.bf16.msra.mxu0 0
        %473 = vmatprep.subr.bf16.mxu0 0
        %474 = vmatpush1.bf16.msra.mxu0 0
        %475 = vmatprep.subr.bf16.mxu0 0
        %476 = vmatpush1.bf16.msra.mxu0 0
        %477 = vmatprep.mubr.bf16.mxu0 0
        %478 = vmatmul.mubr.bf16.gmra.mrb[0].mxu0 %v357
        %v479 = vpop.f32.mrb[0].mxu0
        %v480 = vadd.f32 %v334, %v479
        %v481 = vpop.f32.mrb[0].mxu0
        %v482 = vadd.f32 %v338, %v481
        %v483 = vpop.f32.mrb[0].mxu0
        %v484 = vadd.f32 %v334, %v483
        %v485 = vpop.f32.mrb[0].mxu0
        %v486 = vadd.f32 %v338, %v485
        %487 = vmatprep.mubr.bf16.mxu0 0
        %488 = vmatmul.mubr.bf16.gmra.mrb[0].mxu0 %v358
        %v489 = vpop.f32.mrb[0].mxu0
        %v490 = vadd.f32 %v334, %v489
        %v491 = vpop.f32.mrb[0].mxu0
        %v492 = vadd.f32 %v338, %v491
        %v493 = vpop.f32.mrb[0].mxu0
        %v494 = vadd.f32 %v334, %v493
        %v495 = vpop.f32.mrb[0].mxu0
        %v496 = vadd.f32 %v338, %v495
        %497 = vmatprep.mubr.bf16.mxu0 0
        %498 = vmatmul.mubr.bf16.gmra.mrb[0].mxu0 %v359
        %v499 = vpop.f32.mrb[0].mxu0
        %v500 = vadd.f32 %v334, %v499
        %v501 = vpop.f32.mrb[0].mxu0
        %v502 = vadd.f32 %v338, %v501
        %v503 = vpop.f32.mrb[0].mxu0
        %v504 = vadd.f32 %v334, %v503
        %v505 = vpop.f32.mrb[0].mxu0
        %v506 = vadd.f32 %v338, %v505
        %507 = vmatprep.mubr.bf16.mxu0 0
        %508 = vmatmul.mubr.bf16.gmra.mrb[0].mxu0 %v360
        %v509 = vpop.f32.mrb[0].mxu0
        %v510 = vadd.f32 %v334, %v509
        %v511 = vpop.f32.mrb[0].mxu0
        %v512 = vadd.f32 %v338, %v511
        %v513 = vpop.f32.mrb[0].mxu0
        %v514 = vadd.f32 %v334, %v513
        %v515 = vpop.f32.mrb[0].mxu0
        %v516 = vadd.f32 %v338, %v515
        %517 = vdwg.mxu0
        %v518 = vld [vmem:[#allocation2] sm:$0xff]
        %v519 = vld [vmem:[#allocation2 + $0x8] sm:$0xff]
        %v520 = vld [vmem:[#allocation2 + $0x10] sm:$0xff]
        %v521 = vld [vmem:[#allocation2 + $0x18] sm:$0xff]
        %v522 = vld [vmem:[#allocation2 + $0x20] sm:$0xff]
        %v523 = vld [vmem:[#allocation2 + $0x28] sm:$0xff]
        %v524 = vld [vmem:[#allocation2 + $0x30] sm:$0xff]
        %v525 = vld [vmem:[#allocation2 + $0x38] sm:$0xff]
        %v526 = vmax.f32 %v480, %v482
        %527 = vmax.xlane.f32.xlu0 %v526
        %v528 = vpop.xlane.xlu0 %527
        %v529 = vmax.f32 %v484, %v486
        %530 = vmax.xlane.f32.xlu0 %v529
        %v531 = vpop.xlane.xlu0 %530
        %v532 = vmax.f32 %v490, %v492
        %533 = vmax.xlane.f32.xlu0 %v532
        %v534 = vpop.xlane.xlu0 %533
        %v535 = vmax.f32 %v494, %v496
        %536 = vmax.xlane.f32.xlu0 %v535
        %v537 = vpop.xlane.xlu0 %536
        %v538 = vmax.f32 %v500, %v502
        %539 = vmax.xlane.f32.xlu0 %v538
        %v540 = vpop.xlane.xlu0 %539
        %v541 = vmax.f32 %v504, %v506
        %542 = vmax.xlane.f32.xlu0 %v541
        %v543 = vpop.xlane.xlu0 %542
        %v544 = vmax.f32 %v510, %v512
        %545 = vmax.xlane.f32.xlu0 %v544
        %v546 = vpop.xlane.xlu0 %545
        %v547 = vmax.f32 %v514, %v516
        %548 = vmax.xlane.f32.xlu0 %v547
        %v549 = vpop.xlane.xlu0 %548
        %v550 = vmax.f32 %v518, %v528
        %v551 = vmax.f32 %v519, %v531
        %v552 = vmax.f32 %v520, %v534
        %v553 = vmax.f32 %v521, %v537
        %v554 = vmax.f32 %v522, %v540
        %v555 = vmax.f32 %v523, %v543
        %v556 = vmax.f32 %v524, %v546
        %v557 = vmax.f32 %v525, %v549
        %v558 = vld [vmem:[#allocation3] sm:$0xff]
        %v559 = vld [vmem:[#allocation3 + $0x8] sm:$0xff]
        %v560 = vld [vmem:[#allocation3 + $0x10] sm:$0xff]
        %v561 = vld [vmem:[#allocation3 + $0x18] sm:$0xff]
        %v562 = vld [vmem:[#allocation3 + $0x20] sm:$0xff]
        %v563 = vld [vmem:[#allocation3 + $0x28] sm:$0xff]
        %v564 = vld [vmem:[#allocation3 + $0x30] sm:$0xff]
        %v565 = vld [vmem:[#allocation3 + $0x38] sm:$0xff]
        %v566 = vsub.f32 %v518, %v550
        %v567 = vsub.f32 %v519, %v551
        %v568 = vsub.f32 %v520, %v552
        %v569 = vsub.f32 %v521, %v553
        %v570 = vsub.f32 %v522, %v554
        %v571 = vsub.f32 %v523, %v555
        %v572 = vsub.f32 %v524, %v556
        %v573 = vsub.f32 %v525, %v557
        %v574 = vmul.f32 %v566, 1.442695
        %v575 = vpow.pop %v574
        %v576 = vmul.f32 %v567, 1.442695
        %v577 = vpow.pop %v576
        %v578 = vmul.f32 %v568, 1.442695
        %v579 = vpow.pop %v578
        %v580 = vmul.f32 %v569, 1.442695
        %v581 = vpow.pop %v580
        %v582 = vmul.f32 %v570, 1.442695
        %v583 = vpow.pop %v582
        %v584 = vmul.f32 %v571, 1.442695
        %v585 = vpow.pop %v584
        %v586 = vmul.f32 %v572, 1.442695
        %v587 = vpow.pop %v586
        %v588 = vmul.f32 %v573, 1.442695
        %v589 = vpow.pop %v588
        %v590 = vmul.f32 %v558, %v575
        %v591 = vmul.f32 %v559, %v577
        %v592 = vmul.f32 %v560, %v579
        %v593 = vmul.f32 %v561, %v581
        %v594 = vmul.f32 %v562, %v583
        %v595 = vmul.f32 %v563, %v585
        %v596 = vmul.f32 %v564, %v587
        %v597 = vmul.f32 %v565, %v589
        %599 = vset.pattern.permute.xlu0 0
        %600 = vperm.xlu0 %599, %v550
        %v601 = vpop.permute.xlu0 %600
        %604 = vset.pattern.permute.xlu0 0
        %605 = vperm.xlu0 %604, %v551
        %v606 = vpop.permute.xlu0 %605
        %609 = vset.pattern.permute.xlu0 0
        %610 = vperm.xlu0 %609, %v552
        %v611 = vpop.permute.xlu0 %610
        %614 = vset.pattern.permute.xlu0 0
        %615 = vperm.xlu0 %614, %v553
        %v616 = vpop.permute.xlu0 %615
        %619 = vset.pattern.permute.xlu0 0
        %620 = vperm.xlu0 %619, %v554
        %v621 = vpop.permute.xlu0 %620
        %624 = vset.pattern.permute.xlu0 0
        %625 = vperm.xlu0 %624, %v555
        %v626 = vpop.permute.xlu0 %625
        %629 = vset.pattern.permute.xlu0 0
        %630 = vperm.xlu0 %629, %v556
        %v631 = vpop.permute.xlu0 %630
        %634 = vset.pattern.permute.xlu0 0
        %635 = vperm.xlu0 %634, %v557
        %v636 = vpop.permute.xlu0 %635
        %v638 = vsub.f32 %v480, %v601
        %v639 = vsub.f32 %v482, %v601
        %v640 = vsub.f32 %v484, %v606
        %v641 = vsub.f32 %v486, %v606
        %v642 = vsub.f32 %v490, %v611
        %v643 = vsub.f32 %v492, %v611
        %v644 = vsub.f32 %v494, %v616
        %v645 = vsub.f32 %v496, %v616
        %v646 = vsub.f32 %v500, %v621
        %v647 = vsub.f32 %v502, %v621
        %v648 = vsub.f32 %v504, %v626
        %v649 = vsub.f32 %v506, %v626
        %v650 = vsub.f32 %v510, %v631
        %v651 = vsub.f32 %v512, %v631
        %v652 = vsub.f32 %v514, %v636
        %v653 = vsub.f32 %v516, %v636
        %v654 = vmul.f32 %v638, 1.442695
        %v655 = vpow.pop %v654
        %v656 = vmul.f32 %v639, 1.442695
        %v657 = vpow.pop %v656
        %v658 = vmul.f32 %v640, 1.442695
        %v659 = vpow.pop %v658
        %v660 = vmul.f32 %v641, 1.442695
        %v661 = vpow.pop %v660
        %v662 = vmul.f32 %v642, 1.442695
        %v663 = vpow.pop %v662
        %v664 = vmul.f32 %v643, 1.442695
        %v665 = vpow.pop %v664
        %v666 = vmul.f32 %v644, 1.442695
        %v667 = vpow.pop %v666
        %v668 = vmul.f32 %v645, 1.442695
        %v669 = vpow.pop %v668
        %v670 = vmul.f32 %v646, 1.442695
        %v671 = vpow.pop %v670
        %v672 = vmul.f32 %v647, 1.442695
        %v673 = vpow.pop %v672
        %v674 = vmul.f32 %v648, 1.442695
        %v675 = vpow.pop %v674
        %v676 = vmul.f32 %v649, 1.442695
        %v677 = vpow.pop %v676
        %v678 = vmul.f32 %v650, 1.442695
        %v679 = vpow.pop %v678
        %v680 = vmul.f32 %v651, 1.442695
        %v681 = vpow.pop %v680
        %v682 = vmul.f32 %v652, 1.442695
        %v683 = vpow.pop %v682
        %v684 = vmul.f32 %v653, 1.442695
        %v685 = vpow.pop %v684
        %v686 = vadd.f32 %v655, %v657
        %687 = vadd.xlane.f32.xlu0 %v686
        %v688 = vpop.xlane.xlu0 %687
        %v689 = vadd.f32 %v659, %v661
        %690 = vadd.xlane.f32.xlu0 %v689
        %v691 = vpop.xlane.xlu0 %690
        %v692 = vadd.f32 %v663, %v665
        %693 = vadd.xlane.f32.xlu0 %v692
        %v694 = vpop.xlane.xlu0 %693
        %v695 = vadd.f32 %v667, %v669
        %696 = vadd.xlane.f32.xlu0 %v695
        %v697 = vpop.xlane.xlu0 %696
        %v698 = vadd.f32 %v671, %v673
        %699 = vadd.xlane.f32.xlu0 %v698
        %v700 = vpop.xlane.xlu0 %699
        %v701 = vadd.f32 %v675, %v677
        %702 = vadd.xlane.f32.xlu0 %v701
        %v703 = vpop.xlane.xlu0 %702
        %v704 = vadd.f32 %v679, %v681
        %705 = vadd.xlane.f32.xlu0 %v704
        %v706 = vpop.xlane.xlu0 %705
        %v707 = vadd.f32 %v683, %v685
        %708 = vadd.xlane.f32.xlu0 %v707
        %v709 = vpop.xlane.xlu0 %708
        %v710 = vadd.f32 %v590, %v688
        %v711 = vadd.f32 %v591, %v691
        %v712 = vadd.f32 %v592, %v694
        %v713 = vadd.f32 %v593, %v697
        %v714 = vadd.f32 %v594, %v700
        %v715 = vadd.f32 %v595, %v703
        %v716 = vadd.f32 %v596, %v706
        %v717 = vadd.f32 %v597, %v709
        %vm718 = vcmask 7168
        %719 = vst.msk [vmem:[#allocation3] sm:$0xff] %vm718, %v710
        %720 = vst.msk [vmem:[#allocation3 + $0x8] sm:$0xff] %vm718, %v711
        %721 = vst.msk [vmem:[#allocation3 + $0x10] sm:$0xff] %vm718, %v712
        %722 = vst.msk [vmem:[#allocation3 + $0x18] sm:$0xff] %vm718, %v713
        %723 = vst.msk [vmem:[#allocation3 + $0x20] sm:$0xff] %vm718, %v714
        %724 = vst.msk [vmem:[#allocation3 + $0x28] sm:$0xff] %vm718, %v715
        %725 = vst.msk [vmem:[#allocation3 + $0x30] sm:$0xff] %vm718, %v716
        %726 = vst.msk [vmem:[#allocation3 + $0x38] sm:$0xff] %vm718, %v717
        %727 = vst.msk [vmem:[#allocation2] sm:$0xff] %vm718, %v550
        %728 = vst.msk [vmem:[#allocation2 + $0x8] sm:$0xff] %vm718, %v551
        %729 = vst.msk [vmem:[#allocation2 + $0x10] sm:$0xff] %vm718, %v552
        %730 = vst.msk [vmem:[#allocation2 + $0x18] sm:$0xff] %vm718, %v553
        %731 = vst.msk [vmem:[#allocation2 + $0x20] sm:$0xff] %vm718, %v554
        %732 = vst.msk [vmem:[#allocation2 + $0x28] sm:$0xff] %vm718, %v555
        %733 = vst.msk [vmem:[#allocation2 + $0x30] sm:$0xff] %vm718, %v556
        %734 = vst.msk [vmem:[#allocation2 + $0x38] sm:$0xff] %vm718, %v557
        %v735 = vld [vmem:[%s244] sm:$0xff]
        %v736 = vld [vmem:[%s244 + $0x8] sm:$0xff]
        %v737 = vld [vmem:[%s244 + $0x10] sm:$0xff]
        %v738 = vld [vmem:[%s244 + $0x18] sm:$0xff]
        %v739 = vld [vmem:[%s244 + $0x20] sm:$0xff]
        %v740 = vld [vmem:[%s244 + $0x28] sm:$0xff]
        %v741 = vld [vmem:[%s244 + $0x30] sm:$0xff]
        %v742 = vld [vmem:[%s244 + $0x38] sm:$0xff]
        %v743 = vstv %s325
        %v744 = vsub.s32 %v735, %v743
        %v745 = vsub.s32 %v736, %v743
        %v746 = vsub.s32 %v737, %v743
        %v747 = vsub.s32 %v738, %v743
        %v748 = vsub.s32 %v739, %v743
        %v749 = vsub.s32 %v740, %v743
        %v750 = vsub.s32 %v741, %v743
        %v751 = vsub.s32 %v742, %v743
        %v752 = vlaneseq
        %v753 = vshrl.u32 %v752, 7
        %v754 = vsub.s32 0, %v753
        %v755 = vrot.slane %v324, %v754
        %v756 = vlaneseq
        %v757 = vshrl.u32 %v756, 7
        %v758 = vsub.s32 1, %v757
        %v759 = vrot.slane %v324, %v758
        %760 = vset.pattern.permute.xlu0 0
        %761 = vperm.xlu0 %760, %v744
        %v762 = vpop.permute.xlu0 %761
        %763 = vset.pattern.permute.xlu0 0
        %764 = vperm.xlu0 %763, %v745
        %v765 = vpop.permute.xlu0 %764
        %766 = vset.pattern.permute.xlu0 0
        %767 = vperm.xlu0 %766, %v746
        %v768 = vpop.permute.xlu0 %767
        %769 = vset.pattern.permute.xlu0 0
        %770 = vperm.xlu0 %769, %v747
        %v771 = vpop.permute.xlu0 %770
        %772 = vset.pattern.permute.xlu0 0
        %773 = vperm.xlu0 %772, %v748
        %v774 = vpop.permute.xlu0 %773
        %775 = vset.pattern.permute.xlu0 0
        %776 = vperm.xlu0 %775, %v749
        %v777 = vpop.permute.xlu0 %776
        %778 = vset.pattern.permute.xlu0 0
        %779 = vperm.xlu0 %778, %v750
        %v780 = vpop.permute.xlu0 %779
        %781 = vset.pattern.permute.xlu0 0
        %782 = vperm.xlu0 %781, %v751
        %v783 = vpop.permute.xlu0 %782
        %vm784 = vcmp.eq.s32.totalorder %v755, %v762
        %vm785 = vcmp.eq.s32.totalorder %v759, %v762
        %vm786 = vcmp.eq.s32.totalorder %v755, %v765
        %vm787 = vcmp.eq.s32.totalorder %v759, %v765
        %vm788 = vcmp.eq.s32.totalorder %v755, %v768
        %vm789 = vcmp.eq.s32.totalorder %v759, %v768
        %vm790 = vcmp.eq.s32.totalorder %v755, %v771
        %vm791 = vcmp.eq.s32.totalorder %v759, %v771
        %vm792 = vcmp.eq.s32.totalorder %v755, %v774
        %vm793 = vcmp.eq.s32.totalorder %v759, %v774
        %vm794 = vcmp.eq.s32.totalorder %v755, %v777
        %vm795 = vcmp.eq.s32.totalorder %v759, %v777
        %vm796 = vcmp.eq.s32.totalorder %v755, %v780
        %vm797 = vcmp.eq.s32.totalorder %v759, %v780
        %vm798 = vcmp.eq.s32.totalorder %v755, %v783
        %vm799 = vcmp.eq.s32.totalorder %v759, %v783
        %v800 = vld [vmem:[#allocation4] sm:$0xff]
        %v801 = vld [vmem:[#allocation4 + $0x8] sm:$0xff]
        %v802 = vld [vmem:[#allocation4 + $0x10] sm:$0xff]
        %v803 = vld [vmem:[#allocation4 + $0x18] sm:$0xff]
        %v804 = vld [vmem:[#allocation4 + $0x20] sm:$0xff]
        %v805 = vld [vmem:[#allocation4 + $0x28] sm:$0xff]
        %v806 = vld [vmem:[#allocation4 + $0x30] sm:$0xff]
        %v807 = vld [vmem:[#allocation4 + $0x38] sm:$0xff]
        %v808 = vsel %vm784, %v480, 0.0
        %v809 = vsel %vm785, %v482, 0.0
        %v810 = vsel %vm786, %v484, 0.0
        %v811 = vsel %vm787, %v486, 0.0
        %v812 = vsel %vm788, %v490, 0.0
        %v813 = vsel %vm789, %v492, 0.0
        %v814 = vsel %vm790, %v494, 0.0
        %v815 = vsel %vm791, %v496, 0.0
        %v816 = vsel %vm792, %v500, 0.0
        %v817 = vsel %vm793, %v502, 0.0
        %v818 = vsel %vm794, %v504, 0.0
        %v819 = vsel %vm795, %v506, 0.0
        %v820 = vsel %vm796, %v510, 0.0
        %v821 = vsel %vm797, %v512, 0.0
        %v822 = vsel %vm798, %v514, 0.0
        %v823 = vsel %vm799, %v516, 0.0
        %v824 = vadd.f32 %v808, %v809
        %825 = vadd.xlane.f32.xlu0 %v824
        %v826 = vpop.xlane.xlu0 %825
        %v827 = vadd.f32 %v810, %v811
        %828 = vadd.xlane.f32.xlu0 %v827
        %v829 = vpop.xlane.xlu0 %828
        %v830 = vadd.f32 %v812, %v813
        %831 = vadd.xlane.f32.xlu0 %v830
        %v832 = vpop.xlane.xlu0 %831
        %v833 = vadd.f32 %v814, %v815
        %834 = vadd.xlane.f32.xlu0 %v833
        %v835 = vpop.xlane.xlu0 %834
        %v836 = vadd.f32 %v816, %v817
        %837 = vadd.xlane.f32.xlu0 %v836
        %v838 = vpop.xlane.xlu0 %837
        %v839 = vadd.f32 %v818, %v819
        %840 = vadd.xlane.f32.xlu0 %v839
        %v841 = vpop.xlane.xlu0 %840
        %v842 = vadd.f32 %v820, %v821
        %843 = vadd.xlane.f32.xlu0 %v842
        %v844 = vpop.xlane.xlu0 %843
        %v845 = vadd.f32 %v822, %v823
        %846 = vadd.xlane.f32.xlu0 %v845
        %v847 = vpop.xlane.xlu0 %846
        %v848 = vadd.f32 %v800, %v826
        %v849 = vadd.f32 %v801, %v829
        %v850 = vadd.f32 %v802, %v832
        %v851 = vadd.f32 %v803, %v835
        %v852 = vadd.f32 %v804, %v838
        %v853 = vadd.f32 %v805, %v841
        %v854 = vadd.f32 %v806, %v844
        %v855 = vadd.f32 %v807, %v847
        %856 = vst.msk [vmem:[#allocation4] sm:$0xff] %vm718, %v848
        %857 = vst.msk [vmem:[#allocation4 + $0x8] sm:$0xff] %vm718, %v849
        %858 = vst.msk [vmem:[#allocation4 + $0x10] sm:$0xff] %vm718, %v850
        %859 = vst.msk [vmem:[#allocation4 + $0x18] sm:$0xff] %vm718, %v851
        %860 = vst.msk [vmem:[#allocation4 + $0x20] sm:$0xff] %vm718, %v852
        %861 = vst.msk [vmem:[#allocation4 + $0x28] sm:$0xff] %vm718, %v853
        %862 = vst.msk [vmem:[#allocation4 + $0x30] sm:$0xff] %vm718, %v854
        %863 = vst.msk [vmem:[#allocation4 + $0x38] sm:$0xff] %vm718, %v855
        %p864 = scmp.eq.s32.totalorder %s25, 1
        // Predicated region
        $region41: #{tpu_custom_call.1} parent=31 // pred_check
          %p865 = pneg %p864
        $region42: #{tpu_custom_call.1} parent=31 // pred_check_branch
          %867 = sbr.rel (%p865) target = $region44
        $region43: #{tpu_custom_call.1} parent=31 // pred_region
          %v868 = vld [vmem:[#allocation2] sm:$0xff]
          %v869 = vld [vmem:[#allocation2 + $0x8] sm:$0xff]
          %v870 = vld [vmem:[#allocation2 + $0x10] sm:$0xff]
          %v871 = vld [vmem:[#allocation2 + $0x18] sm:$0xff]
          %v872 = vld [vmem:[#allocation2 + $0x20] sm:$0xff]
          %v873 = vld [vmem:[#allocation2 + $0x28] sm:$0xff]
          %v874 = vld [vmem:[#allocation2 + $0x30] sm:$0xff]
          %v875 = vld [vmem:[#allocation2 + $0x38] sm:$0xff]
          %v876 = vld [vmem:[#allocation3] sm:$0xff]
          %v877 = vld [vmem:[#allocation3 + $0x8] sm:$0xff]
          %v878 = vld [vmem:[#allocation3 + $0x10] sm:$0xff]
          %v879 = vld [vmem:[#allocation3 + $0x18] sm:$0xff]
          %v880 = vld [vmem:[#allocation3 + $0x20] sm:$0xff]
          %v881 = vld [vmem:[#allocation3 + $0x28] sm:$0xff]
          %v882 = vld [vmem:[#allocation3 + $0x30] sm:$0xff]
          %v883 = vld [vmem:[#allocation3 + $0x38] sm:$0xff]
          %v884 = vlog2.pop %v876
          %v885 = vmul.f32 %v884, 0.6931472
          %v886 = vlog2.pop %v877
          %v887 = vmul.f32 %v886, 0.6931472
          %v888 = vlog2.pop %v878
          %v889 = vmul.f32 %v888, 0.6931472
          %v890 = vlog2.pop %v879
          %v891 = vmul.f32 %v890, 0.6931472
          %v892 = vlog2.pop %v880
          %v893 = vmul.f32 %v892, 0.6931472
          %v894 = vlog2.pop %v881
          %v895 = vmul.f32 %v894, 0.6931472
          %v896 = vlog2.pop %v882
          %v897 = vmul.f32 %v896, 0.6931472
          %v898 = vlog2.pop %v883
          %v899 = vmul.f32 %v898, 0.6931472
          %v900 = vadd.f32 %v868, %v885
          %v901 = vadd.f32 %v869, %v887
          %v902 = vadd.f32 %v870, %v889
          %v903 = vadd.f32 %v871, %v891
          %v904 = vadd.f32 %v872, %v893
          %v905 = vadd.f32 %v873, %v895
          %v906 = vadd.f32 %v874, %v897
          %v907 = vadd.f32 %v875, %v899
          %v908 = vld [vmem:[#allocation4] sm:$0xff]
          %v909 = vld [vmem:[#allocation4 + $0x8] sm:$0xff]
          %v910 = vld [vmem:[#allocation4 + $0x10] sm:$0xff]
          %v911 = vld [vmem:[#allocation4 + $0x18] sm:$0xff]
          %v912 = vld [vmem:[#allocation4 + $0x20] sm:$0xff]
          %v913 = vld [vmem:[#allocation4 + $0x28] sm:$0xff]
          %v914 = vld [vmem:[#allocation4 + $0x30] sm:$0xff]
          %v915 = vld [vmem:[#allocation4 + $0x38] sm:$0xff]
          %v916 = vsub.f32 %v908, %v900
          %v917 = vsub.f32 %v909, %v901
          %v918 = vsub.f32 %v910, %v902
          %v919 = vsub.f32 %v911, %v903
          %v920 = vsub.f32 %v912, %v904
          %v921 = vsub.f32 %v913, %v905
          %v922 = vsub.f32 %v914, %v906
          %v923 = vsub.f32 %v915, %v907
          %925 = vset.pattern.permute.xlu0 0
          %926 = vperm.xlu0 %925, %v916
          %v927 = vpop.permute.xlu0 %926
          %930 = vset.pattern.permute.xlu0 0
          %931 = vperm.xlu0 %930, %v917
          %v932 = vpop.permute.xlu0 %931
          %935 = vset.pattern.permute.xlu0 0
          %936 = vperm.xlu0 %935, %v918
          %v937 = vpop.permute.xlu0 %936
          %940 = vset.pattern.permute.xlu0 0
          %941 = vperm.xlu0 %940, %v919
          %v942 = vpop.permute.xlu0 %941
          %945 = vset.pattern.permute.xlu0 0
          %946 = vperm.xlu0 %945, %v920
          %v947 = vpop.permute.xlu0 %946
          %950 = vset.pattern.permute.xlu0 0
          %951 = vperm.xlu0 %950, %v921
          %v952 = vpop.permute.xlu0 %951
          %955 = vset.pattern.permute.xlu0 0
          %956 = vperm.xlu0 %955, %v922
          %v957 = vpop.permute.xlu0 %956
          %960 = vset.pattern.permute.xlu0 0
          %961 = vperm.xlu0 %960, %v923
          %v962 = vpop.permute.xlu0 %961
          %964 = vst [vmem:[%s232] sm:$0xff] %v927
          %965 = vst [vmem:[%s232 + $0x8] sm:$0xff] %v932
          %966 = vst [vmem:[%s232 + $0x10] sm:$0xff] %v937
          %967 = vst [vmem:[%s232 + $0x18] sm:$0xff] %v942
          %968 = vst [vmem:[%s232 + $0x20] sm:$0xff] %v947
          %969 = vst [vmem:[%s232 + $0x28] sm:$0xff] %v952
          %970 = vst [vmem:[%s232 + $0x30] sm:$0xff] %v957
          %971 = vst [vmem:[%s232 + $0x38] sm:$0xff] %v962
        $region44: #{tpu_custom_call.1} parent=31 // pred_fallthru
          _
        %s972 = sand.u32 %s118, 1
        %s973 = scalar_lea.sflag [#allocation8], %s972
        %s974 = sand.u32 %s118, 1
        %s975 = smul.addr %s974, 64
        %s976 = scalar_lea.vmem [#allocation9], %s975
        // Predicated region
        $region45: #{tpu_custom_call.1} parent=31 // pred_check
          %p977 = pneg %p128
        $region46: #{tpu_custom_call.1} parent=31 // pred_check_branch
          %979 = sbr.rel (%p977) target = $region48
        $region47: #{tpu_custom_call.1} parent=31 // pred_region
          %s980 = smul.u32 8, %s24
          %s982 = ssub.s32 1024, 1024
          %983 = vsyncadd %s973, %s982
          %s984 = smul.addr %s980, 128
          %s985 = scalar_lea.hbm %s3, %s984
          %s986 = sshll.u32 %s976, 4
          %s987 = int_to_ptr.vmem [resolvable:$true] %s986
          %992 = dma.vmem_to_hbm [thread:$0]  %s987, 1024, %s985, %s973, 128, 128, 8
        $region48: #{tpu_custom_call.1} parent=31 // pred_fallthru
          _
      $region32: #{tpu_custom_call.1} parent=5 // pred_fallthru
        _
      %p993 = scmp.le.s32.totalorder 2, %s15
      // Predicated region
      $region49: #{tpu_custom_call.1} parent=5 // pred_check
        %p994 = pneg %p993
      $region50: #{tpu_custom_call.1} parent=5 // pred_check_branch
        %996 = sbr.rel (%p994) target = $region52
      $region51: #{tpu_custom_call.1} parent=5 // pred_region
        %s997 = ssub.s32 %s15, 2
        // Predicated region
        $region53: #{tpu_custom_call.1} parent=51 // pred_check
          %p998 = pneg %p134
        $region54: #{tpu_custom_call.1} parent=51 // pred_check_branch
          %1000 = sbr.rel (%p998) target = $region56
        $region55: #{tpu_custom_call.1} parent=51 // pred_region
          %s1001 = sand.u32 %s119, 1
          %s1002 = scalar_lea.sflag [#allocation8], %s1001
          %s1003 = sand.u32 %s119, 1
          %s1004 = smul.addr %s1003, 64
          %s1005 = scalar_lea.vmem [#allocation9], %s1004
          %1006 = dma.done %s1002, 1024
        $region56: #{tpu_custom_call.1} parent=51 // pred_fallthru
          _
      $region52: #{tpu_custom_call.1} parent=5 // pred_fallthru
        _
    $region6: #{tpu_custom_call.1} parent=1 // loop_footer
      %s19 = sadd.s32 1, %s15
    $region7: #{tpu_custom_call.1} parent=1 // loop_footer_branch
      %14 = sbr.rel target = $region3
    $region8: #{tpu_custom_call.1} parent=1 // loop_exit
      _
    %1007 = vsyncpa [#allocation7], 1
    %s1008 = scalar_lea.sflag [#allocation7], 1
    %1009 = vsyncpa %s1008, 1
    %1010 = vsyncpa [#allocation8], 1
    %s1011 = scalar_lea.sflag [#allocation8], 1
    %1012 = vsyncpa %s1011, 1

</llo_original>
